<compile_context>
chip_gen: v7x
topology: tpu7x:2x2x1
jax: 0.10.0
libtpu: 0.0.40
codegen_flags: <defaults>
</compile_context>

<pallas_src>
import functools

import jax
import jax.numpy as jnp
from jax import lax
from jax.experimental import pallas as pl
from jax.experimental.pallas import tpu as pltpu


_LEAKY_SLOPE = 0.2
_MIN_BLOCK_ROWS = 2048         # tile//128 multiple of 16 -> bf16 sublane aligned
_MAX_BLOCK_ROWS = 1_048_576    # 2*(4+4)*1M rows = 16 MiB double-buffered (v7x-safe)


def _round_up(a, b):
    return ((a + b - 1) // b) * b


def _hyper_bool_net_kernel(
    seed_ref,   # SMEM (2,)  f32 : hyper-net input (seed, reshaped (1,2) in torch)
    w1a_ref,    # SMEM (6,)  f32 : weight_maker1 Linear(2,3).weight, (3,2) row-major
    b1a_ref,    # SMEM (3,)  f32
    w1b_ref,    # SMEM (12,) f32 : weight_maker1 Linear(3,4).weight, (4,3) row-major
    b1b_ref,    # SMEM (4,)  f32
    w2a_ref,    # SMEM (6,)  f32 : weight_maker2 Linear(2,3).weight, (3,2) row-major
    b2a_ref,    # SMEM (3,)  f32
    w2b_ref,    # SMEM (6,)  f32 : weight_maker2 Linear(3,2).weight, (2,3) row-major
    b2b_ref,    # SMEM (2,)  f32
    bias_ref,   # SMEM (1,)  f32 : self._bias_maker
    x_ref,      # VMEM (2, tile//128, 128) bf16 (or f32) : batch on sublanes+lanes
    o_ref,      # VMEM (tile//128, 128) f32
):
    s0 = seed_ref[0]
    s1 = seed_ref[1]

    def leaky(v):
        return jnp.where(v > 0.0, v, _LEAKY_SLOPE * v)

    # ---- hyper-network (~40 scalar ops on the scalar unit, effectively free) ----
    # weight_maker1: Linear(2,3) -> LeakyReLU(0.2) -> Linear(3,4); .resize(2,2)
    t = [leaky(s0 * w1a_ref[2 * k + 0] + s1 * w1a_ref[2 * k + 1] + b1a_ref[k])
         for k in range(3)]
    l1 = [t[0] * w1b_ref[3 * j + 0] + t[1] * w1b_ref[3 * j + 1]
          + t[2] * w1b_ref[3 * j + 2] + b1b_ref[j]
          for j in range(4)]        # layer1 = [[l1[0], l1[1]], [l1[2], l1[3]]]

    # weight_maker2: Linear(2,3) -> LeakyReLU(0.2) -> Linear(3,2); .resize(2,1)
    u = [leaky(s0 * w2a_ref[2 * k + 0] + s1 * w2a_ref[2 * k + 1] + b2a_ref[k])
         for k in range(3)]
    l2 = [u[0] * w2b_ref[3 * j + 0] + u[1] * w2b_ref[3 * j + 1]
          + u[2] * w2b_ref[3 * j + 2] + b2b_ref[j]
          for j in range(2)]        # layer2 = [[l2[0]], [l2[1]]]

    bias = bias_ref[0]

    # ---- main data path: lane-dense VPU FMAs, consumed in small row-chunks ----
    n_sub = o_ref.shape[0]          # tile // 128, a multiple of 16
    chunk = 32 if n_sub % 32 == 0 else 16     # 4K / 2K data rows per chunk
    n_chunks = n_sub // chunk

    def compute_chunk(c):
        r = pl.multiple_of(c * chunk, chunk)
        x0 = x_ref[0, pl.ds(r, chunk), :].astype(jnp.float32)   # feature 0
        x1 = x_ref[1, pl.ds(r, chunk), :].astype(jnp.float32)   # feature 1
        h0 = jnp.maximum(l1[0] * x0 + l1[2] * x1, 0.0)  # ReLU((x @ layer1)[:, 0])
        h1 = jnp.maximum(l1[1] * x0 + l1[3] * x1, 0.0)  # ReLU((x @ layer1)[:, 1])
        o_ref[pl.ds(r, chunk), :] = h0 * l2[0] + h1 * l2[1] + bias

    if n_chunks == 1:
        compute_chunk(0)
    else:
        def body(c, carry):
            compute_chunk(c)
            return carry
        lax.fori_loop(0, n_chunks, body, 0,
                      unroll=True if n_chunks <= 8 else 8)


@functools.partial(jax.jit, static_argnames=("tile_rows", "boolean_input"))
def hyper_bool_net(x, seed, params, *, tile_rows=262144, boolean_input=True):
    """HyperBoolNet forward.  x: (N, 2) f32, seed: (2,) f32.  Returns (N, 1) f32.

    boolean_input=True ships x over HBM as bf16, which is exact only because the
    module's inputs are boolean {0, 1}; pass False for general float features.
    """
    if x.ndim != 2 or x.shape[1] != 2:
        raise ValueError(f"expected x of shape (N, 2), got {x.shape}")
    n = x.shape[0]

    # ---- block / grid selection (pure Python ints; shapes are static) ----
    tile_rows = min(max(_round_up(int(tile_rows), _MIN_BLOCK_ROWS), _MIN_BLOCK_ROWS),
                    _MAX_BLOCK_ROWS)
    n_min = _round_up(n, _MIN_BLOCK_ROWS)
    if n_min >= 2 * _MIN_BLOCK_ROWS:
        # Guarantee >=2 grid steps so ("parallel",) shards across both v7x TCs.
        tile = min(tile_rows, _round_up(n_min // 2, _MIN_BLOCK_ROWS))
    else:
        tile = n_min                    # single small block
    n_pad = _round_up(n, tile)
    grid = n_pad // tile

    lane_dtype = jnp.bfloat16 if boolean_input else jnp.float32
    bytes_per_row = 2 * jnp.dtype(lane_dtype).itemsize + 4

    x_pad = jnp.pad(x.astype(lane_dtype), ((0, n_pad - n), (0, 0)))
    # Layout plumbing (fused under jit): batch on sublanes+lanes, features major.
    x_lanes = x_pad.T.reshape(2, n_pad // 128, 128)

    smem = pl.BlockSpec(memory_space=pltpu.MemorySpace.SMEM)

    out = pl.pallas_call(
        _hyper_bool_net_kernel,
        out_shape=jax.ShapeDtypeStruct((n_pad // 128, 128), jnp.float32),
        grid=(grid,),
        in_specs=[smem] * 10 + [
            pl.BlockSpec((2, tile // 128, 128), lambda i: (0, i, 0)),
        ],
        out_specs=pl.BlockSpec((tile // 128, 128), lambda i: (i, 0)),
        compiler_params=pltpu.CompilerParams(
            dimension_semantics=("parallel",),          # dual-TC sharding on v7x
            vmem_limit_bytes=32 * 1024 * 1024,          # covers v5e's 16 MiB default
        ),
        cost_estimate=pl.CostEstimate(                  # pure HBM-roofline op
            flops=11 * n_pad,
            transcendentals=0,
            bytes_accessed=bytes_per_row * n_pad + 256,
        ),
    )(
        seed.astype(jnp.float32).reshape(2),
        params["wm1_w1"], params["wm1_b1"], params["wm1_w2"], params["wm1_b2"],
        params["wm2_w1"], params["wm2_b1"], params["wm2_w2"], params["wm2_b2"],
        params["bias"],
        x_lanes,
    )

    # Undo the lane packing; padded rows (== bias) are sliced off here.
    return out.reshape(n_pad)[:n].reshape(n, 1)


def init_params(key):
    """nn.Linear-style uniform(-1/sqrt(fan_in), +1/sqrt(fan_in)) init.
    Weights are flattened in PyTorch (out_features, in_features) row-major order."""
    ks = jax.random.split(key, 9)

    def u(k, shape, fan_in):
        b = 1.0 / jnp.sqrt(float(fan_in))
        return jax.random.uniform(k, shape, jnp.float32, -b, b)

    return {
        "wm1_w1": u(ks[0], (6,), 2),    # Linear(2,3).weight  (3,2)
        "wm1_b1": u(ks[1], (3,), 2),
        "wm1_w2": u(ks[2], (12,), 3),   # Linear(3,4).weight  (4,3)
        "wm1_b2": u(ks[3], (4,), 3),
        "wm2_w1": u(ks[4], (6,), 2),    # Linear(2,3).weight  (3,2)
        "wm2_b1": u(ks[5], (3,), 2),
        "wm2_w2": u(ks[6], (6,), 3),    # Linear(3,2).weight  (2,3)
        "wm2_b2": u(ks[7], (2,), 3),
        # The module initializes _bias_maker to zeros; use a random value so the
        # test actually exercises the bias-add path (semantics are identical).
        "bias":   u(ks[8], (1,), 1),
    }


def _reference_forward(x, seed, p):
    """Pure-JAX replica of HyperBoolNet.forward for the correctness check."""
    s = seed.reshape(1, 2)
    t = s @ p["wm1_w1"].reshape(3, 2).T + p["wm1_b1"]
    t = jnp.where(t > 0, t, _LEAKY_SLOPE * t)
    layer1 = (t @ p["wm1_w2"].reshape(4, 3).T + p["wm1_b2"]).reshape(2, 2)
    v = s @ p["wm2_w1"].reshape(3, 2).T + p["wm2_b1"]
    v = jnp.where(v > 0, v, _LEAKY_SLOPE * v)
    layer2 = (v @ p["wm2_w2"].reshape(2, 3).T + p["wm2_b2"]).reshape(2, 1)
    return jnp.maximum(x @ layer1, 0.0) @ layer2 + p["bias"]


if __name__ == "__main__":
    key = jax.random.PRNGKey(0)
    kx, kx2, ks, kp = jax.random.split(key, 4)

    params = init_params(kp)
    seed = jax.random.normal(ks, (2,), jnp.float32)

    # Primary small test (single grid step), boolean inputs in {0, 1}.
    batch = 8
    x = jax.random.bernoulli(kx, 0.5, (batch, 2)).astype(jnp.float32)
    y = jax.block_until_ready(hyper_bool_net(x, seed, params))
    y_ref = _reference_forward(x, seed, params)
    assert y.shape == (batch, 1), y.shape
    assert jnp.allclose(y, y_ref, atol=1e-5, rtol=1e-5), (y, y_ref)

    # Secondary test exercising grid >= 2, chunked body and pad slice-off.
    batch2 = 4100
    x2 = jax.random.bernoulli(kx2, 0.5, (batch2, 2)).astype(jnp.float32)
    y2 = jax.block_until_ready(hyper_bool_net(x2, seed, params))
    y2_ref = _reference_forward(x2, seed, params)
    assert y2.shape == (batch2, 1), y2.shape
    assert jnp.allclose(y2, y2_ref, atol=1e-5, rtol=1e-5)

    print("KERNEL_OK")
</pallas_src>

<mosaic_0001>
module attributes {stable_mosaic.version = 11 : i64} {
  func.func @_hyper_bool_net_kernel(%arg0: i32, %arg1: memref<2xf32, #tpu.memory_space<smem>>, %arg2: memref<6xf32, #tpu.memory_space<smem>>, %arg3: memref<3xf32, #tpu.memory_space<smem>>, %arg4: memref<12xf32, #tpu.memory_space<smem>>, %arg5: memref<4xf32, #tpu.memory_space<smem>>, %arg6: memref<6xf32, #tpu.memory_space<smem>>, %arg7: memref<3xf32, #tpu.memory_space<smem>>, %arg8: memref<6xf32, #tpu.memory_space<smem>>, %arg9: memref<2xf32, #tpu.memory_space<smem>>, %arg10: memref<1xf32, #tpu.memory_space<smem>>, %arg11: memref<2x16x128xbf16, #tpu.memory_space<vmem>>, %arg12: memref<16x128xf32, #tpu.memory_space<vmem>>) attributes {dimension_semantics = [#tpu.dimension_semantics<parallel>], iteration_bounds = array<i64: 1>, scalar_prefetch = 0 : i64, scratch_operands = 0 : i64, tpu.core_type = #tpu.core_type<tc>, window_params = [{transform_indices = @transform_0, window_bounds = array<i64: 2>}, {transform_indices = @transform_1, window_bounds = array<i64: 6>}, {transform_indices = @transform_2, window_bounds = array<i64: 3>}, {transform_indices = @transform_3, window_bounds = array<i64: 12>}, {transform_indices = @transform_4, window_bounds = array<i64: 4>}, {transform_indices = @transform_5, window_bounds = array<i64: 6>}, {transform_indices = @transform_6, window_bounds = array<i64: 3>}, {transform_indices = @transform_7, window_bounds = array<i64: 6>}, {transform_indices = @transform_8, window_bounds = array<i64: 2>}, {transform_indices = @transform_9, window_bounds = array<i64: 1>}, {transform_indices = @transform_10, window_bounds = array<i64: 2, 16, 128>}, {transform_indices = @transform_11, window_bounds = array<i64: 16, 128>}]} {
    %c0 = arith.constant 0 : index
    %0 = memref.load %arg1[%c0] : memref<2xf32, #tpu.memory_space<smem>>
    %c1 = arith.constant 1 : index
    %1 = memref.load %arg1[%c1] : memref<2xf32, #tpu.memory_space<smem>>
    %c0_0 = arith.constant 0 : index
    %2 = memref.load %arg2[%c0_0] : memref<6xf32, #tpu.memory_space<smem>>
    %3 = arith.mulf %0, %2 : f32
    %c1_1 = arith.constant 1 : index
    %4 = memref.load %arg2[%c1_1] : memref<6xf32, #tpu.memory_space<smem>>
    %5 = arith.mulf %1, %4 : f32
    %6 = arith.addf %3, %5 : f32
    %c0_2 = arith.constant 0 : index
    %7 = memref.load %arg3[%c0_2] : memref<3xf32, #tpu.memory_space<smem>>
    %8 = arith.addf %6, %7 : f32
    %cst = arith.constant 0.000000e+00 : f32
    %9 = arith.cmpf ogt, %8, %cst : f32
    %cst_3 = arith.constant 2.000000e-01 : f32
    %10 = arith.mulf %cst_3, %8 : f32
    %11 = arith.select %9, %8, %10 : f32
    %c2 = arith.constant 2 : index
    %12 = memref.load %arg2[%c2] : memref<6xf32, #tpu.memory_space<smem>>
    %13 = arith.mulf %0, %12 : f32
    %c3 = arith.constant 3 : index
    %14 = memref.load %arg2[%c3] : memref<6xf32, #tpu.memory_space<smem>>
    %15 = arith.mulf %1, %14 : f32
    %16 = arith.addf %13, %15 : f32
    %c1_4 = arith.constant 1 : index
    %17 = memref.load %arg3[%c1_4] : memref<3xf32, #tpu.memory_space<smem>>
    %18 = arith.addf %16, %17 : f32
    %cst_5 = arith.constant 0.000000e+00 : f32
    %19 = arith.cmpf ogt, %18, %cst_5 : f32
    %cst_6 = arith.constant 2.000000e-01 : f32
    %20 = arith.mulf %cst_6, %18 : f32
    %21 = arith.select %19, %18, %20 : f32
    %c4 = arith.constant 4 : index
    %22 = memref.load %arg2[%c4] : memref<6xf32, #tpu.memory_space<smem>>
    %23 = arith.mulf %0, %22 : f32
    %c5 = arith.constant 5 : index
    %24 = memref.load %arg2[%c5] : memref<6xf32, #tpu.memory_space<smem>>
    %25 = arith.mulf %1, %24 : f32
    %26 = arith.addf %23, %25 : f32
    %c2_7 = arith.constant 2 : index
    %27 = memref.load %arg3[%c2_7] : memref<3xf32, #tpu.memory_space<smem>>
    %28 = arith.addf %26, %27 : f32
    %cst_8 = arith.constant 0.000000e+00 : f32
    %29 = arith.cmpf ogt, %28, %cst_8 : f32
    %cst_9 = arith.constant 2.000000e-01 : f32
    %30 = arith.mulf %cst_9, %28 : f32
    %31 = arith.select %29, %28, %30 : f32
    %c0_10 = arith.constant 0 : index
    %32 = memref.load %arg4[%c0_10] : memref<12xf32, #tpu.memory_space<smem>>
    %33 = arith.mulf %11, %32 : f32
    %c1_11 = arith.constant 1 : index
    %34 = memref.load %arg4[%c1_11] : memref<12xf32, #tpu.memory_space<smem>>
    %35 = arith.mulf %21, %34 : f32
    %36 = arith.addf %33, %35 : f32
    %c2_12 = arith.constant 2 : index
    %37 = memref.load %arg4[%c2_12] : memref<12xf32, #tpu.memory_space<smem>>
    %38 = arith.mulf %31, %37 : f32
    %39 = arith.addf %36, %38 : f32
    %c0_13 = arith.constant 0 : index
    %40 = memref.load %arg5[%c0_13] : memref<4xf32, #tpu.memory_space<smem>>
    %41 = arith.addf %39, %40 : f32
    %c3_14 = arith.constant 3 : index
    %42 = memref.load %arg4[%c3_14] : memref<12xf32, #tpu.memory_space<smem>>
    %43 = arith.mulf %11, %42 : f32
    %c4_15 = arith.constant 4 : index
    %44 = memref.load %arg4[%c4_15] : memref<12xf32, #tpu.memory_space<smem>>
    %45 = arith.mulf %21, %44 : f32
    %46 = arith.addf %43, %45 : f32
    %c5_16 = arith.constant 5 : index
    %47 = memref.load %arg4[%c5_16] : memref<12xf32, #tpu.memory_space<smem>>
    %48 = arith.mulf %31, %47 : f32
    %49 = arith.addf %46, %48 : f32
    %c1_17 = arith.constant 1 : index
    %50 = memref.load %arg5[%c1_17] : memref<4xf32, #tpu.memory_space<smem>>
    %51 = arith.addf %49, %50 : f32
    %c6 = arith.constant 6 : index
    %52 = memref.load %arg4[%c6] : memref<12xf32, #tpu.memory_space<smem>>
    %53 = arith.mulf %11, %52 : f32
    %c7 = arith.constant 7 : index
    %54 = memref.load %arg4[%c7] : memref<12xf32, #tpu.memory_space<smem>>
    %55 = arith.mulf %21, %54 : f32
    %56 = arith.addf %53, %55 : f32
    %c8 = arith.constant 8 : index
    %57 = memref.load %arg4[%c8] : memref<12xf32, #tpu.memory_space<smem>>
    %58 = arith.mulf %31, %57 : f32
    %59 = arith.addf %56, %58 : f32
    %c2_18 = arith.constant 2 : index
    %60 = memref.load %arg5[%c2_18] : memref<4xf32, #tpu.memory_space<smem>>
    %61 = arith.addf %59, %60 : f32
    %c9 = arith.constant 9 : index
    %62 = memref.load %arg4[%c9] : memref<12xf32, #tpu.memory_space<smem>>
    %63 = arith.mulf %11, %62 : f32
    %c10 = arith.constant 10 : index
    %64 = memref.load %arg4[%c10] : memref<12xf32, #tpu.memory_space<smem>>
    %65 = arith.mulf %21, %64 : f32
    %66 = arith.addf %63, %65 : f32
    %c11 = arith.constant 11 : index
    %67 = memref.load %arg4[%c11] : memref<12xf32, #tpu.memory_space<smem>>
    %68 = arith.mulf %31, %67 : f32
    %69 = arith.addf %66, %68 : f32
    %c3_19 = arith.constant 3 : index
    %70 = memref.load %arg5[%c3_19] : memref<4xf32, #tpu.memory_space<smem>>
    %71 = arith.addf %69, %70 : f32
    %c0_20 = arith.constant 0 : index
    %72 = memref.load %arg6[%c0_20] : memref<6xf32, #tpu.memory_space<smem>>
    %73 = arith.mulf %0, %72 : f32
    %c1_21 = arith.constant 1 : index
    %74 = memref.load %arg6[%c1_21] : memref<6xf32, #tpu.memory_space<smem>>
    %75 = arith.mulf %1, %74 : f32
    %76 = arith.addf %73, %75 : f32
    %c0_22 = arith.constant 0 : index
    %77 = memref.load %arg7[%c0_22] : memref<3xf32, #tpu.memory_space<smem>>
    %78 = arith.addf %76, %77 : f32
    %cst_23 = arith.constant 0.000000e+00 : f32
    %79 = arith.cmpf ogt, %78, %cst_23 : f32
    %cst_24 = arith.constant 2.000000e-01 : f32
    %80 = arith.mulf %cst_24, %78 : f32
    %81 = arith.select %79, %78, %80 : f32
    %c2_25 = arith.constant 2 : index
    %82 = memref.load %arg6[%c2_25] : memref<6xf32, #tpu.memory_space<smem>>
    %83 = arith.mulf %0, %82 : f32
    %c3_26 = arith.constant 3 : index
    %84 = memref.load %arg6[%c3_26] : memref<6xf32, #tpu.memory_space<smem>>
    %85 = arith.mulf %1, %84 : f32
    %86 = arith.addf %83, %85 : f32
    %c1_27 = arith.constant 1 : index
    %87 = memref.load %arg7[%c1_27] : memref<3xf32, #tpu.memory_space<smem>>
    %88 = arith.addf %86, %87 : f32
    %cst_28 = arith.constant 0.000000e+00 : f32
    %89 = arith.cmpf ogt, %88, %cst_28 : f32
    %cst_29 = arith.constant 2.000000e-01 : f32
    %90 = arith.mulf %cst_29, %88 : f32
    %91 = arith.select %89, %88, %90 : f32
    %c4_30 = arith.constant 4 : index
    %92 = memref.load %arg6[%c4_30] : memref<6xf32, #tpu.memory_space<smem>>
    %93 = arith.mulf %0, %92 : f32
    %c5_31 = arith.constant 5 : index
    %94 = memref.load %arg6[%c5_31] : memref<6xf32, #tpu.memory_space<smem>>
    %95 = arith.mulf %1, %94 : f32
    %96 = arith.addf %93, %95 : f32
    %c2_32 = arith.constant 2 : index
    %97 = memref.load %arg7[%c2_32] : memref<3xf32, #tpu.memory_space<smem>>
    %98 = arith.addf %96, %97 : f32
    %cst_33 = arith.constant 0.000000e+00 : f32
    %99 = arith.cmpf ogt, %98, %cst_33 : f32
    %cst_34 = arith.constant 2.000000e-01 : f32
    %100 = arith.mulf %cst_34, %98 : f32
    %101 = arith.select %99, %98, %100 : f32
    %c0_35 = arith.constant 0 : index
    %102 = memref.load %arg8[%c0_35] : memref<6xf32, #tpu.memory_space<smem>>
    %103 = arith.mulf %81, %102 : f32
    %c1_36 = arith.constant 1 : index
    %104 = memref.load %arg8[%c1_36] : memref<6xf32, #tpu.memory_space<smem>>
    %105 = arith.mulf %91, %104 : f32
    %106 = arith.addf %103, %105 : f32
    %c2_37 = arith.constant 2 : index
    %107 = memref.load %arg8[%c2_37] : memref<6xf32, #tpu.memory_space<smem>>
    %108 = arith.mulf %101, %107 : f32
    %109 = arith.addf %106, %108 : f32
    %c0_38 = arith.constant 0 : index
    %110 = memref.load %arg9[%c0_38] : memref<2xf32, #tpu.memory_space<smem>>
    %111 = arith.addf %109, %110 : f32
    %c3_39 = arith.constant 3 : index
    %112 = memref.load %arg8[%c3_39] : memref<6xf32, #tpu.memory_space<smem>>
    %113 = arith.mulf %81, %112 : f32
    %c4_40 = arith.constant 4 : index
    %114 = memref.load %arg8[%c4_40] : memref<6xf32, #tpu.memory_space<smem>>
    %115 = arith.mulf %91, %114 : f32
    %116 = arith.addf %113, %115 : f32
    %c5_41 = arith.constant 5 : index
    %117 = memref.load %arg8[%c5_41] : memref<6xf32, #tpu.memory_space<smem>>
    %118 = arith.mulf %101, %117 : f32
    %119 = arith.addf %116, %118 : f32
    %c1_42 = arith.constant 1 : index
    %120 = memref.load %arg9[%c1_42] : memref<2xf32, #tpu.memory_space<smem>>
    %121 = arith.addf %119, %120 : f32
    %c0_43 = arith.constant 0 : index
    %122 = memref.load %arg10[%c0_43] : memref<1xf32, #tpu.memory_space<smem>>
    %c0_i32 = arith.constant 0 : i32
    %123 = tpu.assume_multiple %c0_i32, 16 : i32
    %c0_44 = arith.constant 0 : index
    %124 = arith.index_cast %123 : i32 to index
    %c0_45 = arith.constant 0 : index
    %125 = vector.load %arg11[%c0_44, %124, %c0_45] : memref<2x16x128xbf16, #tpu.memory_space<vmem>>, vector<1x16x128xbf16>
    %126 = vector.shape_cast %125 : vector<1x16x128xbf16> to vector<16x128xbf16>
    %127 = arith.extf %126 : vector<16x128xbf16> to vector<16x128xf32>
    %c1_46 = arith.constant 1 : index
    %128 = arith.index_cast %123 : i32 to index
    %c0_47 = arith.constant 0 : index
    %129 = vector.load %arg11[%c1_46, %128, %c0_47] : memref<2x16x128xbf16, #tpu.memory_space<vmem>>, vector<1x16x128xbf16>
    %130 = vector.shape_cast %129 : vector<1x16x128xbf16> to vector<16x128xbf16>
    %131 = arith.extf %130 : vector<16x128xbf16> to vector<16x128xf32>
    %132 = vector.broadcast %41 : f32 to vector<16x128xf32>
    %133 = arith.mulf %132, %127 : vector<16x128xf32>
    %134 = vector.broadcast %61 : f32 to vector<16x128xf32>
    %135 = arith.mulf %134, %131 : vector<16x128xf32>
    %136 = arith.addf %133, %135 : vector<16x128xf32>
    %cst_48 = arith.constant 0.000000e+00 : f32
    %137 = vector.broadcast %cst_48 : f32 to vector<16x128xf32>
    %138 = arith.maximumf %136, %137 : vector<16x128xf32>
    %139 = vector.broadcast %51 : f32 to vector<16x128xf32>
    %140 = arith.mulf %139, %127 : vector<16x128xf32>
    %141 = vector.broadcast %71 : f32 to vector<16x128xf32>
    %142 = arith.mulf %141, %131 : vector<16x128xf32>
    %143 = arith.addf %140, %142 : vector<16x128xf32>
    %cst_49 = arith.constant 0.000000e+00 : f32
    %144 = vector.broadcast %cst_49 : f32 to vector<16x128xf32>
    %145 = arith.maximumf %143, %144 : vector<16x128xf32>
    %146 = vector.broadcast %111 : f32 to vector<16x128xf32>
    %147 = arith.mulf %138, %146 : vector<16x128xf32>
    %148 = vector.broadcast %121 : f32 to vector<16x128xf32>
    %149 = arith.mulf %145, %148 : vector<16x128xf32>
    %150 = arith.addf %147, %149 : vector<16x128xf32>
    %151 = vector.broadcast %122 : f32 to vector<16x128xf32>
    %152 = arith.addf %150, %151 : vector<16x128xf32>
    %153 = arith.index_cast %123 : i32 to index
    %c0_50 = arith.constant 0 : index
    %154 = vector.load %arg12[%153, %c0_50] : memref<16x128xf32, #tpu.memory_space<vmem>>, vector<16x128xf32>
    tpu.vector_store %arg12[%153, %c0_50], %152 {strides = array<i32>} : memref<16x128xf32, #tpu.memory_space<vmem>>, vector<16x128xf32>,
    return
  }
  func.func @transform_0(%arg0: i32) -> i32 {
    %c0_i32 = arith.constant 0 : i32
    %c0_i32_0 = arith.constant 0 : i32
    return %c0_i32 : i32
  }
  func.func @transform_1(%arg0: i32) -> i32 {
    %c0_i32 = arith.constant 0 : i32
    %c0_i32_0 = arith.constant 0 : i32
    return %c0_i32 : i32
  }
  func.func @transform_2(%arg0: i32) -> i32 {
    %c0_i32 = arith.constant 0 : i32
    %c0_i32_0 = arith.constant 0 : i32
    return %c0_i32 : i32
  }
  func.func @transform_3(%arg0: i32) -> i32 {
    %c0_i32 = arith.constant 0 : i32
    %c0_i32_0 = arith.constant 0 : i32
    return %c0_i32 : i32
  }
  func.func @transform_4(%arg0: i32) -> i32 {
    %c0_i32 = arith.constant 0 : i32
    %c0_i32_0 = arith.constant 0 : i32
    return %c0_i32 : i32
  }
  func.func @transform_5(%arg0: i32) -> i32 {
    %c0_i32 = arith.constant 0 : i32
    %c0_i32_0 = arith.constant 0 : i32
    return %c0_i32 : i32
  }
  func.func @transform_6(%arg0: i32) -> i32 {
    %c0_i32 = arith.constant 0 : i32
    %c0_i32_0 = arith.constant 0 : i32
    return %c0_i32 : i32
  }
  func.func @transform_7(%arg0: i32) -> i32 {
    %c0_i32 = arith.constant 0 : i32
    %c0_i32_0 = arith.constant 0 : i32
    return %c0_i32 : i32
  }
  func.func @transform_8(%arg0: i32) -> i32 {
    %c0_i32 = arith.constant 0 : i32
    %c0_i32_0 = arith.constant 0 : i32
    return %c0_i32 : i32
  }
  func.func @transform_9(%arg0: i32) -> i32 {
    %c0_i32 = arith.constant 0 : i32
    %c0_i32_0 = arith.constant 0 : i32
    return %c0_i32 : i32
  }
  func.func @transform_10(%arg0: i32) -> (i32, i32, i32) {
    %c0_i32 = arith.constant 0 : i32
    %c0_i32_0 = arith.constant 0 : i32
    %c0_i32_1 = arith.constant 0 : i32
    return %c0_i32, %arg0, %c0_i32_0 : i32, i32, i32
  }
  func.func @transform_11(%arg0: i32) -> (i32, i32) {
    %c0_i32 = arith.constant 0 : i32
    %c0_i32_0 = arith.constant 0 : i32
    return %arg0, %c0_i32 : i32, i32
  }
}

</mosaic_0001>

<llo_original>
// kernel: hyper_bool_net.1
$region0: #{hyper_bool_net.1}
  #allocation0 [shape = 'u32[]', space=smem, size = 0x4, offset = 0x4, fixed_abs, tag = 'smem constant byte address 0x4 - core index']
  #allocation1 [shape = 'u32[144,128]{1,0:T(1,128)}', space=vmem, size = 0x12000, scoped, tag = 'internal scratch']
  #allocation2 [shape = 'f32[1]{0:T(128)S(6)}', space=smem, size = 0x200, scoped, tag = 'scoped memory for hyper_bool_net.1']
  %s0 = inlined_call_operand.vmem [shape: f32[2], index: 0, kind: input, shape index: {}]
  %s1 = inlined_call_operand.vmem [shape: f32[6], index: 1, kind: input, shape index: {}]
  %s2 = inlined_call_operand.vmem [shape: f32[3], index: 2, kind: input, shape index: {}]
  %s3 = inlined_call_operand.vmem [shape: f32[12], index: 3, kind: input, shape index: {}]
  %s4 = inlined_call_operand.vmem [shape: f32[4], index: 4, kind: input, shape index: {}]
  %s5 = inlined_call_operand.vmem [shape: f32[6], index: 5, kind: input, shape index: {}]
  %s6 = inlined_call_operand.vmem [shape: f32[3], index: 6, kind: input, shape index: {}]
  %s7 = inlined_call_operand.vmem [shape: f32[6], index: 7, kind: input, shape index: {}]
  %s8 = inlined_call_operand.vmem [shape: f32[2], index: 8, kind: input, shape index: {}]
  %s9 = inlined_call_operand.<no memory space> [shape: f32[1], index: 9, kind: input, shape index: {}]
  %s10 = inlined_call_operand.vmem [shape: bf16[2,16,128], index: 10, kind: input, shape index: {}]
  %s11 = inlined_call_operand.vmem [shape: f32[16,128], index: 11, kind: output, shape index: {}]
  %s12 = sld [smem:[#allocation0]]
  $region90: #{hyper_bool_net.1} parent=0
    _
  %s14 = ssub.s32 1, %s12
  %s15 = scalar_select 0, %s14, %s12
  %16 = sst [smem:[#allocation2]] %s9
  $region1: #{hyper_bool_net.1} parent=0
    #allocation3 [shape = 'u8[512]{0}', space=smem, size = 0x200, scoped, tag = 'input window, operand 0, single buffered']
    #allocation4 [shape = 's32[1]{0}', space=sflag, size = 0x4, scoped, tag = 'scoped memory for hyper_bool_net.1']
    #allocation5 [shape = 'u8[512]{0}', space=smem, size = 0x200, scoped, tag = 'input window, operand 1, single buffered']
    #allocation6 [shape = 's32[1]{0}', space=sflag, size = 0x4, scoped, tag = 'scoped memory for hyper_bool_net.1']
    #allocation7 [shape = 'u8[512]{0}', space=smem, size = 0x200, scoped, tag = 'input window, operand 2, single buffered']
    #allocation8 [shape = 'u8[512]{0}', space=smem, size = 0x200, scoped, tag = 'input window, operand 3, single buffered']
    #allocation9 [shape = 's32[1]{0}', space=sflag, size = 0x4, scoped, tag = 'scoped memory for hyper_bool_net.1']
    #allocation10 [shape = 'u8[512]{0}', space=smem, size = 0x200, scoped, tag = 'input window, operand 4, single buffered']
    #allocation11 [shape = 'u8[512]{0}', space=smem, size = 0x200, scoped, tag = 'input window, operand 5, single buffered']
    #allocation12 [shape = 's32[1]{0}', space=sflag, size = 0x4, scoped, tag = 'scoped memory for hyper_bool_net.1']
    #allocation13 [shape = 'u8[512]{0}', space=smem, size = 0x200, scoped, tag = 'input window, operand 6, single buffered']
    #allocation14 [shape = 'u8[512]{0}', space=smem, size = 0x200, scoped, tag = 'input window, operand 7, single buffered']
    #allocation15 [shape = 's32[1]{0}', space=sflag, size = 0x4, scoped, tag = 'scoped memory for hyper_bool_net.1']
    #allocation16 [shape = 'u8[512]{0}', space=smem, size = 0x200, scoped, tag = 'input window, operand 8, single buffered']
    %17 = vsyncpa [#allocation4], 0
    %18 = vsyncpa [#allocation6], 0
    %19 = vsyncpa [#allocation9], 0
    %20 = vsyncpa [#allocation12], 0
    %21 = vsyncpa [#allocation15], 0
    // Predicated region
    $region2: #{hyper_bool_net.1} parent=1 // pred_check
      _
    $region3: #{hyper_bool_net.1} parent=1 // pred_check_branch
      %23 = sbr.rel (0) target = $region5
    $region4: #{hyper_bool_net.1} parent=1 // pred_region
      %s25 = ssub.s32 16, 16
      %26 = vsyncadd [#allocation4], %s25
      %s28 = sshll.u32 %s0, 4
      %s29 = int_to_ptr.vmem [resolvable:$true] %s28
      %31 = dma.vmem_to_smem %s29, 16, [#allocation3], [#allocation4]
    $region5: #{hyper_bool_net.1} parent=1 // pred_fallthru
      _
    // Predicated region
    $region6: #{hyper_bool_net.1} parent=1 // pred_check
      _
    $region7: #{hyper_bool_net.1} parent=1 // pred_check_branch
      %33 = sbr.rel (0) target = $region9
    $region8: #{hyper_bool_net.1} parent=1 // pred_region
      %s35 = ssub.s32 16, 16
      %36 = vsyncadd [#allocation6], %s35
      %s38 = sshll.u32 %s1, 4
      %s39 = int_to_ptr.vmem [resolvable:$true] %s38
      %41 = dma.vmem_to_smem %s39, 16, [#allocation5], [#allocation6]
    $region9: #{hyper_bool_net.1} parent=1 // pred_fallthru
      _
    // Predicated region
    $region10: #{hyper_bool_net.1} parent=1 // pred_check
      _
    $region11: #{hyper_bool_net.1} parent=1 // pred_check_branch
      %43 = sbr.rel (0) target = $region13
    $region12: #{hyper_bool_net.1} parent=1 // pred_region
      %s45 = ssub.s32 16, 16
      %46 = vsyncadd [#allocation6], %s45
      %s48 = sshll.u32 %s2, 4
      %s49 = int_to_ptr.vmem [resolvable:$true] %s48
      %51 = dma.vmem_to_smem %s49, 16, [#allocation7], [#allocation6]
    $region13: #{hyper_bool_net.1} parent=1 // pred_fallthru
      _
    // Predicated region
    $region14: #{hyper_bool_net.1} parent=1 // pred_check
      _
    $region15: #{hyper_bool_net.1} parent=1 // pred_check_branch
      %53 = sbr.rel (0) target = $region17
    $region16: #{hyper_bool_net.1} parent=1 // pred_region
      %s55 = ssub.s32 16, 16
      %56 = vsyncadd [#allocation9], %s55
      %s58 = sshll.u32 %s3, 4
      %s59 = int_to_ptr.vmem [resolvable:$true] %s58
      %61 = dma.vmem_to_smem %s59, 16, [#allocation8], [#allocation9]
    $region17: #{hyper_bool_net.1} parent=1 // pred_fallthru
      _
    // Predicated region
    $region18: #{hyper_bool_net.1} parent=1 // pred_check
      _
    $region19: #{hyper_bool_net.1} parent=1 // pred_check_branch
      %63 = sbr.rel (0) target = $region21
    $region20: #{hyper_bool_net.1} parent=1 // pred_region
      %s65 = ssub.s32 16, 16
      %66 = vsyncadd [#allocation9], %s65
      %s68 = sshll.u32 %s4, 4
      %s69 = int_to_ptr.vmem [resolvable:$true] %s68
      %71 = dma.vmem_to_smem %s69, 16, [#allocation10], [#allocation9]
    $region21: #{hyper_bool_net.1} parent=1 // pred_fallthru
      _
    // Predicated region
    $region22: #{hyper_bool_net.1} parent=1 // pred_check
      _
    $region23: #{hyper_bool_net.1} parent=1 // pred_check_branch
      %73 = sbr.rel (0) target = $region25
    $region24: #{hyper_bool_net.1} parent=1 // pred_region
      %s75 = ssub.s32 16, 16
      %76 = vsyncadd [#allocation12], %s75
      %s78 = sshll.u32 %s5, 4
      %s79 = int_to_ptr.vmem [resolvable:$true] %s78
      %81 = dma.vmem_to_smem %s79, 16, [#allocation11], [#allocation12]
    $region25: #{hyper_bool_net.1} parent=1 // pred_fallthru
      _
    // Predicated region
    $region26: #{hyper_bool_net.1} parent=1 // pred_check
      _
    $region27: #{hyper_bool_net.1} parent=1 // pred_check_branch
      %83 = sbr.rel (0) target = $region29
    $region28: #{hyper_bool_net.1} parent=1 // pred_region
      %s85 = ssub.s32 16, 16
      %86 = vsyncadd [#allocation12], %s85
      %s88 = sshll.u32 %s6, 4
      %s89 = int_to_ptr.vmem [resolvable:$true] %s88
      %91 = dma.vmem_to_smem %s89, 16, [#allocation13], [#allocation12]
    $region29: #{hyper_bool_net.1} parent=1 // pred_fallthru
      _
    // Predicated region
    $region30: #{hyper_bool_net.1} parent=1 // pred_check
      _
    $region31: #{hyper_bool_net.1} parent=1 // pred_check_branch
      %93 = sbr.rel (0) target = $region33
    $region32: #{hyper_bool_net.1} parent=1 // pred_region
      %s95 = ssub.s32 16, 16
      %96 = vsyncadd [#allocation15], %s95
      %s98 = sshll.u32 %s7, 4
      %s99 = int_to_ptr.vmem [resolvable:$true] %s98
      %101 = dma.vmem_to_smem %s99, 16, [#allocation14], [#allocation15]
    $region33: #{hyper_bool_net.1} parent=1 // pred_fallthru
      _
    // Predicated region
    $region34: #{hyper_bool_net.1} parent=1 // pred_check
      _
    $region35: #{hyper_bool_net.1} parent=1 // pred_check_branch
      %103 = sbr.rel (0) target = $region37
    $region36: #{hyper_bool_net.1} parent=1 // pred_region
      %s105 = ssub.s32 16, 16
      %106 = vsyncadd [#allocation15], %s105
      %s108 = sshll.u32 %s8, 4
      %s109 = int_to_ptr.vmem [resolvable:$true] %s108
      %111 = dma.vmem_to_smem %s109, 16, [#allocation16], [#allocation15]
    $region37: #{hyper_bool_net.1} parent=1 // pred_fallthru
      _
    // Predicated region
    $region38: #{hyper_bool_net.1} parent=1 // pred_check
      _
    $region39: #{hyper_bool_net.1} parent=1 // pred_check_branch
      %113 = sbr.rel (0) target = $region41
    $region40: #{hyper_bool_net.1} parent=1 // pred_region
      _
    $region41: #{hyper_bool_net.1} parent=1 // pred_fallthru
      _
    // Predicated region
    $region42: #{hyper_bool_net.1} parent=1 // pred_check
      _
    $region43: #{hyper_bool_net.1} parent=1 // pred_check_branch
      %115 = sbr.rel (0) target = $region45
    $region44: #{hyper_bool_net.1} parent=1 // pred_region
      _
    $region45: #{hyper_bool_net.1} parent=1 // pred_fallthru
      _
    // Predicated region
    $region46: #{hyper_bool_net.1} parent=1 // pred_check
      _
    $region47: #{hyper_bool_net.1} parent=1 // pred_check_branch
      %117 = sbr.rel (0) target = $region49
    $region48: #{hyper_bool_net.1} parent=1 // pred_region
      %118 = dma.done [#allocation4], 16
    $region49: #{hyper_bool_net.1} parent=1 // pred_fallthru
      _
    // Predicated region
    $region50: #{hyper_bool_net.1} parent=1 // pred_check
      _
    $region51: #{hyper_bool_net.1} parent=1 // pred_check_branch
      %120 = sbr.rel (0) target = $region53
    $region52: #{hyper_bool_net.1} parent=1 // pred_region
      %121 = dma.done [#allocation6], 16
    $region53: #{hyper_bool_net.1} parent=1 // pred_fallthru
      _
    // Predicated region
    $region54: #{hyper_bool_net.1} parent=1 // pred_check
      _
    $region55: #{hyper_bool_net.1} parent=1 // pred_check_branch
      %123 = sbr.rel (0) target = $region57
    $region56: #{hyper_bool_net.1} parent=1 // pred_region
      %124 = dma.done [#allocation6], 16
    $region57: #{hyper_bool_net.1} parent=1 // pred_fallthru
      _
    // Predicated region
    $region58: #{hyper_bool_net.1} parent=1 // pred_check
      _
    $region59: #{hyper_bool_net.1} parent=1 // pred_check_branch
      %126 = sbr.rel (0) target = $region61
    $region60: #{hyper_bool_net.1} parent=1 // pred_region
      %127 = dma.done [#allocation9], 16
    $region61: #{hyper_bool_net.1} parent=1 // pred_fallthru
      _
    // Predicated region
    $region62: #{hyper_bool_net.1} parent=1 // pred_check
      _
    $region63: #{hyper_bool_net.1} parent=1 // pred_check_branch
      %129 = sbr.rel (0) target = $region65
    $region64: #{hyper_bool_net.1} parent=1 // pred_region
      %130 = dma.done [#allocation9], 16
    $region65: #{hyper_bool_net.1} parent=1 // pred_fallthru
      _
    // Predicated region
    $region66: #{hyper_bool_net.1} parent=1 // pred_check
      _
    $region67: #{hyper_bool_net.1} parent=1 // pred_check_branch
      %132 = sbr.rel (0) target = $region69
    $region68: #{hyper_bool_net.1} parent=1 // pred_region
      %133 = dma.done [#allocation12], 16
    $region69: #{hyper_bool_net.1} parent=1 // pred_fallthru
      _
    // Predicated region
    $region70: #{hyper_bool_net.1} parent=1 // pred_check
      _
    $region71: #{hyper_bool_net.1} parent=1 // pred_check_branch
      %135 = sbr.rel (0) target = $region73
    $region72: #{hyper_bool_net.1} parent=1 // pred_region
      %136 = dma.done [#allocation12], 16
    $region73: #{hyper_bool_net.1} parent=1 // pred_fallthru
      _
    // Predicated region
    $region74: #{hyper_bool_net.1} parent=1 // pred_check
      _
    $region75: #{hyper_bool_net.1} parent=1 // pred_check_branch
      %138 = sbr.rel (0) target = $region77
    $region76: #{hyper_bool_net.1} parent=1 // pred_region
      %139 = dma.done [#allocation15], 16
    $region77: #{hyper_bool_net.1} parent=1 // pred_fallthru
      _
    // Predicated region
    $region78: #{hyper_bool_net.1} parent=1 // pred_check
      _
    $region79: #{hyper_bool_net.1} parent=1 // pred_check_branch
      %141 = sbr.rel (0) target = $region81
    $region80: #{hyper_bool_net.1} parent=1 // pred_region
      %142 = dma.done [#allocation15], 16
    $region81: #{hyper_bool_net.1} parent=1 // pred_fallthru
      _
    %143 = sfence
    %s144 = sld [smem:[#allocation3]]
    %s145 = sld [smem:[#allocation3 + $0x1]]
    %s146 = sld [smem:[#allocation5]]
    %s147 = smul.f32 %s144, %s146
    %s148 = sld [smem:[#allocation5 + $0x1]]
    %s149 = smul.f32 %s145, %s148
    %s150 = sadd.f32 %s147, %s149
    %s151 = sld [smem:[#allocation7]]
    %s152 = sadd.f32 %s150, %s151
    %p153 = scmp.gt.f32.partialorder %s152, 0.0
    %s154 = smul.f32 %s152, 0.2
    %s155 = scalar_select %p153, %s152, %s154
    %s156 = sld [smem:[#allocation5 + $0x2]]
    %s157 = smul.f32 %s144, %s156
    %s158 = sld [smem:[#allocation5 + $0x3]]
    %s159 = smul.f32 %s145, %s158
    %s160 = sadd.f32 %s157, %s159
    %s161 = sld [smem:[#allocation7 + $0x1]]
    %s162 = sadd.f32 %s160, %s161
    %p163 = scmp.gt.f32.partialorder %s162, 0.0
    %s164 = smul.f32 %s162, 0.2
    %s165 = scalar_select %p163, %s162, %s164
    %s166 = sld [smem:[#allocation5 + $0x4]]
    %s167 = smul.f32 %s144, %s166
    %s168 = sld [smem:[#allocation5 + $0x5]]
    %s169 = smul.f32 %s145, %s168
    %s170 = sadd.f32 %s167, %s169
    %s171 = sld [smem:[#allocation7 + $0x2]]
    %s172 = sadd.f32 %s170, %s171
    %p173 = scmp.gt.f32.partialorder %s172, 0.0
    %s174 = smul.f32 %s172, 0.2
    %s175 = scalar_select %p173, %s172, %s174
    %s176 = sld [smem:[#allocation8]]
    %s177 = smul.f32 %s155, %s176
    %s178 = sld [smem:[#allocation8 + $0x1]]
    %s179 = smul.f32 %s165, %s178
    %s180 = sadd.f32 %s177, %s179
    %s181 = sld [smem:[#allocation8 + $0x2]]
    %s182 = smul.f32 %s175, %s181
    %s183 = sadd.f32 %s180, %s182
    %s184 = sld [smem:[#allocation10]]
    %s185 = sadd.f32 %s183, %s184
    %s186 = sld [smem:[#allocation8 + $0x3]]
    %s187 = smul.f32 %s155, %s186
    %s188 = sld [smem:[#allocation8 + $0x4]]
    %s189 = smul.f32 %s165, %s188
    %s190 = sadd.f32 %s187, %s189
    %s191 = sld [smem:[#allocation8 + $0x5]]
    %s192 = smul.f32 %s175, %s191
    %s193 = sadd.f32 %s190, %s192
    %s194 = sld [smem:[#allocation10 + $0x1]]
    %s195 = sadd.f32 %s193, %s194
    %s196 = sld [smem:[#allocation8 + $0x6]]
    %s197 = smul.f32 %s155, %s196
    %s198 = sld [smem:[#allocation8 + $0x7]]
    %s199 = smul.f32 %s165, %s198
    %s200 = sadd.f32 %s197, %s199
    %s201 = sld [smem:[#allocation8 + $0x8]]
    %s202 = smul.f32 %s175, %s201
    %s203 = sadd.f32 %s200, %s202
    %s204 = sld [smem:[#allocation10 + $0x2]]
    %s205 = sadd.f32 %s203, %s204
    %s206 = sld [smem:[#allocation8 + $0x9]]
    %s207 = smul.f32 %s155, %s206
    %s208 = sld [smem:[#allocation8 + $0xa]]
    %s209 = smul.f32 %s165, %s208
    %s210 = sadd.f32 %s207, %s209
    %s211 = sld [smem:[#allocation8 + $0xb]]
    %s212 = smul.f32 %s175, %s211
    %s213 = sadd.f32 %s210, %s212
    %s214 = sld [smem:[#allocation10 + $0x3]]
    %s215 = sadd.f32 %s213, %s214
    %s216 = sld [smem:[#allocation11]]
    %s217 = smul.f32 %s144, %s216
    %s218 = sld [smem:[#allocation11 + $0x1]]
    %s219 = smul.f32 %s145, %s218
    %s220 = sadd.f32 %s217, %s219
    %s221 = sld [smem:[#allocation13]]
    %s222 = sadd.f32 %s220, %s221
    %p223 = scmp.gt.f32.partialorder %s222, 0.0
    %s224 = smul.f32 %s222, 0.2
    %s225 = scalar_select %p223, %s222, %s224
    %s226 = sld [smem:[#allocation11 + $0x2]]
    %s227 = smul.f32 %s144, %s226
    %s228 = sld [smem:[#allocation11 + $0x3]]
    %s229 = smul.f32 %s145, %s228
    %s230 = sadd.f32 %s227, %s229
    %s231 = sld [smem:[#allocation13 + $0x1]]
    %s232 = sadd.f32 %s230, %s231
    %p233 = scmp.gt.f32.partialorder %s232, 0.0
    %s234 = smul.f32 %s232, 0.2
    %s235 = scalar_select %p233, %s232, %s234
    %s236 = sld [smem:[#allocation11 + $0x4]]
    %s237 = smul.f32 %s144, %s236
    %s238 = sld [smem:[#allocation11 + $0x5]]
    %s239 = smul.f32 %s145, %s238
    %s240 = sadd.f32 %s237, %s239
    %s241 = sld [smem:[#allocation13 + $0x2]]
    %s242 = sadd.f32 %s240, %s241
    %p243 = scmp.gt.f32.partialorder %s242, 0.0
    %s244 = smul.f32 %s242, 0.2
    %s245 = scalar_select %p243, %s242, %s244
    %s246 = sld [smem:[#allocation14]]
    %s247 = smul.f32 %s225, %s246
    %s248 = sld [smem:[#allocation14 + $0x1]]
    %s249 = smul.f32 %s235, %s248
    %s250 = sadd.f32 %s247, %s249
    %s251 = sld [smem:[#allocation14 + $0x2]]
    %s252 = smul.f32 %s245, %s251
    %s253 = sadd.f32 %s250, %s252
    %s254 = sld [smem:[#allocation16]]
    %s255 = sadd.f32 %s253, %s254
    %s256 = sld [smem:[#allocation14 + $0x3]]
    %s257 = smul.f32 %s225, %s256
    %s258 = sld [smem:[#allocation14 + $0x4]]
    %s259 = smul.f32 %s235, %s258
    %s260 = sadd.f32 %s257, %s259
    %s261 = sld [smem:[#allocation14 + $0x5]]
    %s262 = smul.f32 %s245, %s261
    %s263 = sadd.f32 %s260, %s262
    %s264 = sld [smem:[#allocation16 + $0x1]]
    %s265 = sadd.f32 %s263, %s264
    %s266 = sld [smem:[#allocation2]]
    %v267 = vld [vmem:[%s10] sm:$0xf]
    %v268 = vld [vmem:[%s10 + $0x4] sm:$0xf]
    %v269 = vunpack.c.l.bf16 %v267
    %v270 = vunpack.c.l.bf16 %v268
    %s271 = sadd.s32 0, 2
    %s272 = smul.addr %s271, 4
    %s273 = scalar_lea.vmem %s10, %s272
    %v274 = vld [vmem:[%s273] sm:$0xf]
    %v275 = vld [vmem:[%s273 + $0x4] sm:$0xf]
    %v276 = vunpack.c.l.bf16 %v274
    %v277 = vunpack.c.l.bf16 %v275
    %v278 = vstv %s185
    %v279 = vmul.f32 %v278, %v269
    %v280 = vmul.f32 %v278, %v270
    %v281 = vstv %s205
    %v282 = vmul.f32 %v281, %v276
    %v283 = vmul.f32 %v281, %v277
    %v284 = vadd.f32 %v279, %v282
    %v285 = vadd.f32 %v280, %v283
    %v286 = vmax.f32 %v284, 0.0
    %v287 = vmax.f32 %v285, 0.0
    %v288 = vstv %s195
    %v289 = vmul.f32 %v288, %v269
    %v290 = vmul.f32 %v288, %v270
    %v291 = vstv %s215
    %v292 = vmul.f32 %v291, %v276
    %v293 = vmul.f32 %v291, %v277
    %v294 = vadd.f32 %v289, %v292
    %v295 = vadd.f32 %v290, %v293
    %v296 = vmax.f32 %v294, 0.0
    %v297 = vmax.f32 %v295, 0.0
    %v298 = vstv %s255
    %v299 = vmul.f32 %v286, %v298
    %v300 = vmul.f32 %v287, %v298
    %v301 = vstv %s265
    %v302 = vmul.f32 %v296, %v301
    %v303 = vmul.f32 %v297, %v301
    %v304 = vadd.f32 %v299, %v302
    %v305 = vadd.f32 %v300, %v303
    %v306 = vstv %s266
    %v307 = vadd.f32 %v304, %v306
    %v308 = vadd.f32 %v305, %v306
    %309 = vst [vmem:[%s11] sm:$0xff] %v307
    %310 = vst [vmem:[%s11 + $0x8] sm:$0xff] %v308
    // Predicated region
    $region82: #{hyper_bool_net.1} parent=1 // pred_check
      _
    $region83: #{hyper_bool_net.1} parent=1 // pred_check_branch
      %312 = sbr.rel (0) target = $region85
    $region84: #{hyper_bool_net.1} parent=1 // pred_region
      _
    $region85: #{hyper_bool_net.1} parent=1 // pred_fallthru
      _
    // Predicated region
    $region86: #{hyper_bool_net.1} parent=1 // pred_check
      _
    $region87: #{hyper_bool_net.1} parent=1 // pred_check_branch
      %314 = sbr.rel (0) target = $region89
    $region88: #{hyper_bool_net.1} parent=1 // pred_region
      _
    $region89: #{hyper_bool_net.1} parent=1 // pred_fallthru
      _
    %315 = vsyncpa [#allocation4], 1
    %316 = vsyncpa [#allocation6], 1
    %317 = vsyncpa [#allocation9], 1
    %318 = vsyncpa [#allocation12], 1
    %319 = vsyncpa [#allocation15], 1

</llo_original>
